<compile_context>
chip_gen: v7x
topology: tpu7x:2x2x1
jax: 0.10.0
libtpu: 0.0.40
codegen_flags: <defaults>
</compile_context>

<pallas_src>
import functools

import jax
import jax.numpy as jnp
from jax import lax
from jax.experimental import pallas as pl
from jax.experimental.pallas import tpu as pltpu

_LANE = 128  # lane-dense padding for the final output


# ----------------------------------------------------------------------------
# Single fused Pallas kernel: the whole network, VMEM-resident
# ----------------------------------------------------------------------------
def _fused_net_kernel(x_ref,
                      m1_ref, b1_ref,     # conv1 as dense bf16 operator + f32 bias
                      m2_ref, b2_ref,     # conv2 as dense bf16 operator + f32 bias
                      w3_ref, b3_ref,     # fc1 (pre-transposed, bf16) + f32 bias
                      w4_ref, b4_ref,     # fc2 (pre-transposed, bf16, lane-padded) + f32 bias
                      o_ref):
    # conv1 (dense linear operator on NCHW-flattened input) + bias + ReLU
    h = jnp.dot(x_ref[...], m1_ref[...], preferred_element_type=jnp.float32)
    h = jnp.maximum(h + b1_ref[...], 0.0)
    # conv2 + bias + ReLU
    h = jnp.dot(h.astype(jnp.bfloat16), m2_ref[...],
                preferred_element_type=jnp.float32)
    h = jnp.maximum(h + b2_ref[...], 0.0)
    # flatten is a no-op (already NCHW-flat) -> fc1 + ReLU
    h = jnp.dot(h.astype(jnp.bfloat16), w3_ref[...],
                preferred_element_type=jnp.float32)
    h = jnp.maximum(h + b3_ref[...], 0.0)
    # fc2 (no activation), lane-padded to 128 columns
    h = jnp.dot(h.astype(jnp.bfloat16), w4_ref[...],
                preferred_element_type=jnp.float32)
    o_ref[...] = (h + b4_ref[...]).astype(o_ref.dtype)


def _weight_spec(shape):
    # Whole-array block whose index never changes with the batch grid step,
    # so the operand stays VMEM-resident across the grid.
    return pl.BlockSpec(shape, lambda i: (0, 0))


@functools.partial(jax.jit, static_argnames=("out_dim",))
def cnn2d_simple_forward(x_nchw, fused_ops, *, out_dim):
    """x_nchw: (N, C, H, W) float32; fused_ops: tuple from preprocess_params."""
    n = x_nchw.shape[0]
    d_in = x_nchw.shape[1] * x_nchw.shape[2] * x_nchw.shape[3]

    # Batch tile: at least 8 sublanes, cap at 128 rows per MXU pass.
    tm = 128 if n >= 128 else max(8, -(-n // 8) * 8)
    n_pad = -(-n // tm) * tm

    x_flat = x_nchw.reshape(n, d_in).astype(jnp.bfloat16)   # NCHW flatten
    if n_pad != n:
        x_flat = jnp.pad(x_flat, ((0, n_pad - n), (0, 0)))

    out_pad = fused_ops[-1].shape[1]                         # lane-dense (128)
    operands = (x_flat,) + tuple(fused_ops)

    out = pl.pallas_call(
        _fused_net_kernel,
        out_shape=jax.ShapeDtypeStruct((n_pad, out_pad), jnp.float32),
        grid=(n_pad // tm,),
        in_specs=[pl.BlockSpec((tm, d_in), lambda i: (i, 0))]
                 + [_weight_spec(op.shape) for op in fused_ops],
        out_specs=pl.BlockSpec((tm, out_pad), lambda i: (i, 0)),
        compiler_params=pltpu.CompilerParams(
            dimension_semantics=("parallel",)),
    )(*operands)
    return out[:n, :out_dim]


# ----------------------------------------------------------------------------
# One-time weight preprocessing (NOT in the per-call hot path)
# ----------------------------------------------------------------------------
def preprocess_params(params, *, in_channels, width, output_dim):
    """Lower each Conv2d(3x3, stride=2, pad=1) to a dense (Cin*H*W, Cout*Ho*Wo)
    operator on NCHW-flattened activations (exact linear map, built by pushing
    the one-hot basis through lax.conv at HIGHEST precision), cast the static
    matmul operands to bf16, pre-broadcast conv biases to the flattened layout
    (f32), pre-transpose FC weights, and lane-pad fc2 to 128 output columns.
    """
    ops = []
    c, h, w = in_channels, width, width
    for (wk, bk) in params["convs"]:
        cout = wk.shape[0]
        d_in = c * h * w
        eye = jnp.eye(d_in, dtype=jnp.float32).reshape(d_in, c, h, w)
        y = lax.conv_general_dilated(
            eye, wk.astype(jnp.float32), window_strides=(2, 2),
            padding=((1, 1), (1, 1)),
            dimension_numbers=("NCHW", "OIHW", "NCHW"),
            precision=lax.Precision.HIGHEST)
        ho, wo = int(y.shape[2]), int(y.shape[3])
        m = y.reshape(d_in, cout * ho * wo).astype(jnp.bfloat16)   # (Din, Dout)
        bvec = jnp.repeat(bk.astype(jnp.float32), ho * wo).reshape(1, cout * ho * wo)
        ops.extend([m, bvec])
        c, h, w = cout, ho, wo

    w1, b1 = params["fc1"]
    w2, b2 = params["fc2"]
    fcn = int(w1.shape[0])
    w3 = jnp.asarray(w1, jnp.float32).T.astype(jnp.bfloat16)
    b3 = jnp.asarray(b1, jnp.float32).reshape(1, -1)

    out_pad = max(_LANE, -(-output_dim // _LANE) * _LANE)          # lane-dense
    w4 = (jnp.zeros((fcn, out_pad), jnp.float32)
          .at[:, :output_dim].set(jnp.asarray(w2, jnp.float32).T)
          .astype(jnp.bfloat16))
    b4 = (jnp.zeros((1, out_pad), jnp.float32)
          .at[:, :output_dim].set(jnp.asarray(b2, jnp.float32)))
    ops.extend([w3, b3, w4, b4])
    return tuple(jax.device_put(op) for op in ops)


# ----------------------------------------------------------------------------
# Deterministic parameter construction (shapes per CNN2DSimpleNet.__init__)
# ----------------------------------------------------------------------------
def init_params(key, *, in_channels, width, channel_multiplier, conv_layers,
                fc_neurons, output_dim):
    keys = jax.random.split(key, 2 * conv_layers + 4)
    convs = []
    cin = in_channels
    cout = channel_multiplier
    w_sp = width
    ki = 0
    for _ in range(conv_layers):
        wk = 0.1 * jax.random.normal(keys[ki], (cout, cin, 3, 3), jnp.float32); ki += 1
        bk = 0.1 * jax.random.normal(keys[ki], (cout,), jnp.float32); ki += 1
        convs.append((wk, bk))
        cin = cout
        cout *= 2
        w_sp //= 2
    flatten_size = (cout // 2) * w_sp * w_sp
    fc1_w = 0.1 * jax.random.normal(keys[ki], (fc_neurons, flatten_size), jnp.float32); ki += 1
    fc1_b = 0.1 * jax.random.normal(keys[ki], (fc_neurons,), jnp.float32); ki += 1
    fc2_w = 0.1 * jax.random.normal(keys[ki], (output_dim, fc_neurons), jnp.float32); ki += 1
    fc2_b = 0.1 * jax.random.normal(keys[ki], (output_dim,), jnp.float32); ki += 1
    return {"convs": convs, "fc1": (fc1_w, fc1_b), "fc2": (fc2_w, fc2_b)}, flatten_size


# ----------------------------------------------------------------------------
# Pure-JAX reference (lax.conv on the raw module params) for correctness check
# ----------------------------------------------------------------------------
def reference_forward(x_nchw, params):
    x = x_nchw
    for (w, b) in params["convs"]:
        x = lax.conv_general_dilated(
            x, w, window_strides=(2, 2), padding=((1, 1), (1, 1)),
            dimension_numbers=("NCHW", "OIHW", "NCHW"))
        x = jnp.maximum(x + b[None, :, None, None], 0.0)
    x = x.reshape(x.shape[0], -1)                  # torch's NCHW flatten
    w1, b1 = params["fc1"]
    w2, b2 = params["fc2"]
    x = jnp.maximum(x @ w1.T + b1, 0.0)
    x = x @ w2.T + b2
    return x


if __name__ == "__main__":
    # params equivalent: input_dim=(4, 16), channel_multiplier=4,
    # conv_layers=2, fc_neurons=32, output_dim=10, batch_norm=False
    key = jax.random.PRNGKey(0)
    pkey, xkey, xkey2 = jax.random.split(key, 3)

    params, flatten_size = init_params(
        pkey, in_channels=4, width=16, channel_multiplier=4,
        conv_layers=2, fc_neurons=32, output_dim=10)
    fused_ops = preprocess_params(params, in_channels=4, width=16,
                                  output_dim=10)   # one-time

    # Small check (batch=2, tm padded to 8, grid=1).
    x = jax.random.normal(xkey, (2, 4, 16, 16), jnp.float32)     # NCHW input
    out = jax.block_until_ready(cnn2d_simple_forward(x, fused_ops, out_dim=10))
    ref = jax.block_until_ready(reference_forward(x, params))
    assert out.shape == (2, 10), out.shape
    # bf16 static operators with f32 accumulation -> looser tolerance than f32
    assert jnp.allclose(out, ref, rtol=3e-2, atol=3e-2), "mismatch vs reference (batch=2)"

    # Larger-batch check exercising the batch grid (tm=128, grid=2, padded rows).
    x_big = jax.random.normal(xkey2, (130, 4, 16, 16), jnp.float32)
    out_big = jax.block_until_ready(cnn2d_simple_forward(x_big, fused_ops, out_dim=10))
    ref_big = jax.block_until_ready(reference_forward(x_big, params))
    assert out_big.shape == (130, 10), out_big.shape
    assert jnp.allclose(out_big, ref_big, rtol=3e-2, atol=3e-2), "mismatch vs reference (batch=130)"

    print("KERNEL_OK")
</pallas_src>

<mosaic_0001>
module attributes {stable_mosaic.version = 11 : i64} {
  func.func @_fused_net_kernel(%arg0: i32, %arg1: memref<8x1024xbf16, #tpu.memory_space<vmem>>, %arg2: memref<1024x256xbf16, #tpu.memory_space<vmem>>, %arg3: memref<1x256xf32, #tpu.memory_space<vmem>>, %arg4: memref<256x128xbf16, #tpu.memory_space<vmem>>, %arg5: memref<1x128xf32, #tpu.memory_space<vmem>>, %arg6: memref<128x32xbf16, #tpu.memory_space<vmem>>, %arg7: memref<1x32xf32, #tpu.memory_space<vmem>>, %arg8: memref<32x128xbf16, #tpu.memory_space<vmem>>, %arg9: memref<1x128xf32, #tpu.memory_space<vmem>>, %arg10: memref<8x128xf32, #tpu.memory_space<vmem>>) attributes {dimension_semantics = [#tpu.dimension_semantics<parallel>], iteration_bounds = array<i64: 1>, scalar_prefetch = 0 : i64, scratch_operands = 0 : i64, tpu.core_type = #tpu.core_type<tc>, window_params = [{transform_indices = @transform_0, window_bounds = array<i64: 8, 1024>}, {pipeline_mode = #tpu.pipeline_mode<synchronous>, transform_indices = @transform_1, window_bounds = array<i64: 1024, 256>}, {pipeline_mode = #tpu.pipeline_mode<synchronous>, transform_indices = @transform_2, window_bounds = array<i64: 1, 256>}, {pipeline_mode = #tpu.pipeline_mode<synchronous>, transform_indices = @transform_3, window_bounds = array<i64: 256, 128>}, {pipeline_mode = #tpu.pipeline_mode<synchronous>, transform_indices = @transform_4, window_bounds = array<i64: 1, 128>}, {pipeline_mode = #tpu.pipeline_mode<synchronous>, transform_indices = @transform_5, window_bounds = array<i64: 128, 32>}, {pipeline_mode = #tpu.pipeline_mode<synchronous>, transform_indices = @transform_6, window_bounds = array<i64: 1, 32>}, {pipeline_mode = #tpu.pipeline_mode<synchronous>, transform_indices = @transform_7, window_bounds = array<i64: 32, 128>}, {pipeline_mode = #tpu.pipeline_mode<synchronous>, transform_indices = @transform_8, window_bounds = array<i64: 1, 128>}, {transform_indices = @transform_9, window_bounds = array<i64: 8, 128>}]} {
    %c0 = arith.constant 0 : index
    %c0_0 = arith.constant 0 : index
    %0 = vector.load %arg1[%c0, %c0_0] : memref<8x1024xbf16, #tpu.memory_space<vmem>>, vector<8x1024xbf16>
    %c0_1 = arith.constant 0 : index
    %c0_2 = arith.constant 0 : index
    %1 = vector.load %arg2[%c0_1, %c0_2] : memref<1024x256xbf16, #tpu.memory_space<vmem>>, vector<1024x256xbf16>
    %cst = arith.constant dense<0.000000e+00> : vector<8x256xf32>
    %2 = tpu.matmul %0, %1, %cst {dimension_numbers = #tpu.dot_dimension_numbers<[1], [0], [0], [1], [0, 0, 1, 1], [], []>} : vector<8x1024xbf16>, vector<1024x256xbf16>, vector<8x256xf32> -> vector<8x256xf32>
    %c0_3 = arith.constant 0 : index
    %c0_4 = arith.constant 0 : index
    %3 = vector.load %arg3[%c0_3, %c0_4] : memref<1x256xf32, #tpu.memory_space<vmem>>, vector<1x256xf32>
    %4 = vector.broadcast %3 : vector<1x256xf32> to vector<8x256xf32>
    %5 = arith.addf %2, %4 : vector<8x256xf32>
    %cst_5 = arith.constant 0.000000e+00 : f32
    %6 = vector.broadcast %cst_5 : f32 to vector<8x256xf32>
    %7 = arith.maximumf %5, %6 : vector<8x256xf32>
    %8 = arith.truncf %7 : vector<8x256xf32> to vector<8x256xbf16>
    %c0_6 = arith.constant 0 : index
    %c0_7 = arith.constant 0 : index
    %9 = vector.load %arg4[%c0_6, %c0_7] : memref<256x128xbf16, #tpu.memory_space<vmem>>, vector<256x128xbf16>
    %cst_8 = arith.constant dense<0.000000e+00> : vector<8x128xf32>
    %10 = tpu.matmul %8, %9, %cst_8 {dimension_numbers = #tpu.dot_dimension_numbers<[1], [0], [0], [1], [0, 0, 1, 1], [], []>} : vector<8x256xbf16>, vector<256x128xbf16>, vector<8x128xf32> -> vector<8x128xf32>
    %c0_9 = arith.constant 0 : index
    %c0_10 = arith.constant 0 : index
    %11 = vector.load %arg5[%c0_9, %c0_10] : memref<1x128xf32, #tpu.memory_space<vmem>>, vector<1x128xf32>
    %12 = vector.broadcast %11 : vector<1x128xf32> to vector<8x128xf32>
    %13 = arith.addf %10, %12 : vector<8x128xf32>
    %cst_11 = arith.constant 0.000000e+00 : f32
    %14 = vector.broadcast %cst_11 : f32 to vector<8x128xf32>
    %15 = arith.maximumf %13, %14 : vector<8x128xf32>
    %16 = arith.truncf %15 : vector<8x128xf32> to vector<8x128xbf16>
    %c0_12 = arith.constant 0 : index
    %c0_13 = arith.constant 0 : index
    %17 = vector.load %arg6[%c0_12, %c0_13] : memref<128x32xbf16, #tpu.memory_space<vmem>>, vector<128x32xbf16>
    %cst_14 = arith.constant dense<0.000000e+00> : vector<8x32xf32>
    %18 = tpu.matmul %16, %17, %cst_14 {dimension_numbers = #tpu.dot_dimension_numbers<[1], [0], [0], [1], [0, 0, 1, 1], [], []>} : vector<8x128xbf16>, vector<128x32xbf16>, vector<8x32xf32> -> vector<8x32xf32>
    %c0_15 = arith.constant 0 : index
    %c0_16 = arith.constant 0 : index
    %19 = vector.load %arg7[%c0_15, %c0_16] : memref<1x32xf32, #tpu.memory_space<vmem>>, vector<1x32xf32>
    %20 = vector.broadcast %19 : vector<1x32xf32> to vector<8x32xf32>
    %21 = arith.addf %18, %20 : vector<8x32xf32>
    %cst_17 = arith.constant 0.000000e+00 : f32
    %22 = vector.broadcast %cst_17 : f32 to vector<8x32xf32>
    %23 = arith.maximumf %21, %22 : vector<8x32xf32>
    %24 = arith.truncf %23 : vector<8x32xf32> to vector<8x32xbf16>
    %c0_18 = arith.constant 0 : index
    %c0_19 = arith.constant 0 : index
    %25 = vector.load %arg8[%c0_18, %c0_19] : memref<32x128xbf16, #tpu.memory_space<vmem>>, vector<32x128xbf16>
    %cst_20 = arith.constant dense<0.000000e+00> : vector<8x128xf32>
    %26 = tpu.matmul %24, %25, %cst_20 {dimension_numbers = #tpu.dot_dimension_numbers<[1], [0], [0], [1], [0, 0, 1, 1], [], []>} : vector<8x32xbf16>, vector<32x128xbf16>, vector<8x128xf32> -> vector<8x128xf32>
    %c0_21 = arith.constant 0 : index
    %c0_22 = arith.constant 0 : index
    %27 = vector.load %arg9[%c0_21, %c0_22] : memref<1x128xf32, #tpu.memory_space<vmem>>, vector<1x128xf32>
    %28 = vector.broadcast %27 : vector<1x128xf32> to vector<8x128xf32>
    %29 = arith.addf %26, %28 : vector<8x128xf32>
    %c0_23 = arith.constant 0 : index
    %c0_24 = arith.constant 0 : index
    %30 = vector.load %arg10[%c0_23, %c0_24] : memref<8x128xf32, #tpu.memory_space<vmem>>, vector<8x128xf32>
    tpu.vector_store %arg10[%c0_23, %c0_24], %29 {strides = array<i32>} : memref<8x128xf32, #tpu.memory_space<vmem>>, vector<8x128xf32>,
    return
  }
  func.func @transform_0(%arg0: i32) -> (i32, i32) {
    %c0_i32 = arith.constant 0 : i32
    %c0_i32_0 = arith.constant 0 : i32
    return %arg0, %c0_i32 : i32, i32
  }
  func.func @transform_1(%arg0: i32) -> (i32, i32) {
    %c0_i32 = arith.constant 0 : i32
    %c0_i32_0 = arith.constant 0 : i32
    %c0_i32_1 = arith.constant 0 : i32
    return %c0_i32, %c0_i32_0 : i32, i32
  }
  func.func @transform_2(%arg0: i32) -> (i32, i32) {
    %c0_i32 = arith.constant 0 : i32
    %c0_i32_0 = arith.constant 0 : i32
    %c0_i32_1 = arith.constant 0 : i32
    return %c0_i32, %c0_i32_0 : i32, i32
  }
  func.func @transform_3(%arg0: i32) -> (i32, i32) {
    %c0_i32 = arith.constant 0 : i32
    %c0_i32_0 = arith.constant 0 : i32
    %c0_i32_1 = arith.constant 0 : i32
    return %c0_i32, %c0_i32_0 : i32, i32
  }
  func.func @transform_4(%arg0: i32) -> (i32, i32) {
    %c0_i32 = arith.constant 0 : i32
    %c0_i32_0 = arith.constant 0 : i32
    %c0_i32_1 = arith.constant 0 : i32
    return %c0_i32, %c0_i32_0 : i32, i32
  }
  func.func @transform_5(%arg0: i32) -> (i32, i32) {
    %c0_i32 = arith.constant 0 : i32
    %c0_i32_0 = arith.constant 0 : i32
    %c0_i32_1 = arith.constant 0 : i32
    return %c0_i32, %c0_i32_0 : i32, i32
  }
  func.func @transform_6(%arg0: i32) -> (i32, i32) {
    %c0_i32 = arith.constant 0 : i32
    %c0_i32_0 = arith.constant 0 : i32
    %c0_i32_1 = arith.constant 0 : i32
    return %c0_i32, %c0_i32_0 : i32, i32
  }
  func.func @transform_7(%arg0: i32) -> (i32, i32) {
    %c0_i32 = arith.constant 0 : i32
    %c0_i32_0 = arith.constant 0 : i32
    %c0_i32_1 = arith.constant 0 : i32
    return %c0_i32, %c0_i32_0 : i32, i32
  }
  func.func @transform_8(%arg0: i32) -> (i32, i32) {
    %c0_i32 = arith.constant 0 : i32
    %c0_i32_0 = arith.constant 0 : i32
    %c0_i32_1 = arith.constant 0 : i32
    return %c0_i32, %c0_i32_0 : i32, i32
  }
  func.func @transform_9(%arg0: i32) -> (i32, i32) {
    %c0_i32 = arith.constant 0 : i32
    %c0_i32_0 = arith.constant 0 : i32
    return %arg0, %c0_i32 : i32, i32
  }
}

</mosaic_0001>

<llo_original>
// kernel: cnn2d_simple_forward.1
$region0: #{cnn2d_simple_forward.1}
  #allocation0 [shape = 'u32[]', space=smem, size = 0x4, offset = 0x4, fixed_abs, tag = 'smem constant byte address 0x4 - core index']
  #allocation1 [shape = 'u32[144,128]{1,0:T(1,128)}', space=vmem, size = 0x12000, scoped, tag = 'internal scratch']
  %s0 = inlined_call_operand.vmem [shape: bf16[8,1024], index: 0, kind: input, shape index: {}]
  %s1 = inlined_call_operand.hbm [shape: bf16[1024,256], index: 1, kind: input, shape index: {}]
  %s2 = inlined_call_operand.vmem [shape: f32[1,256], index: 2, kind: input, shape index: {}]
  %s3 = inlined_call_operand.vmem [shape: bf16[256,128], index: 3, kind: input, shape index: {}]
  %s4 = inlined_call_operand.vmem [shape: f32[1,128], index: 4, kind: input, shape index: {}]
  %s5 = inlined_call_operand.vmem [shape: bf16[128,32], index: 5, kind: input, shape index: {}]
  %s6 = inlined_call_operand.vmem [shape: f32[1,32], index: 6, kind: input, shape index: {}]
  %s7 = inlined_call_operand.vmem [shape: bf16[32,128], index: 7, kind: input, shape index: {}]
  %s8 = inlined_call_operand.vmem [shape: f32[1,128], index: 8, kind: input, shape index: {}]
  %s9 = inlined_call_operand.vmem [shape: f32[8,128], index: 9, kind: output, shape index: {}]
  %s10 = sld [smem:[#allocation0]]
  $region50: #{cnn2d_simple_forward.1} parent=0
    _
  %s12 = ssub.s32 1, %s10
  %s13 = scalar_select 0, %s12, %s10
  $region1: #{cnn2d_simple_forward.1} parent=0
    #allocation2 [shape = 'u8[524288]{0}', space=vmem, size = 0x80000, scoped, tag = 'input window, operand 1, single buffered']
    #allocation3 [shape = 's32[1]{0}', space=sflag, size = 0x4, scoped, tag = 'scoped memory for cnn2d_simple_forward.1']
    %14 = vsyncpa [#allocation3], 0
    // Predicated region
    $region2: #{cnn2d_simple_forward.1} parent=1 // pred_check
      _
    $region3: #{cnn2d_simple_forward.1} parent=1 // pred_check_branch
      %16 = sbr.rel (0) target = $region5
    $region4: #{cnn2d_simple_forward.1} parent=1 // pred_region
      _
    $region5: #{cnn2d_simple_forward.1} parent=1 // pred_fallthru
      _
    // Predicated region
    $region6: #{cnn2d_simple_forward.1} parent=1 // pred_check
      _
    $region7: #{cnn2d_simple_forward.1} parent=1 // pred_check_branch
      %18 = sbr.rel (0) target = $region9
    $region8: #{cnn2d_simple_forward.1} parent=1 // pred_region
      %s20 = ssub.s32 16384, 16384
      %21 = vsyncadd [#allocation3], %s20
      %s22 = sshll.u32 [#allocation2], 4
      %s23 = int_to_ptr.vmem [resolvable:$true] %s22
      %28 = dma.hbm_to_vmem [thread:$0]  %s1, 16384, %s23, [#allocation3], 128, 128, 8
    $region9: #{cnn2d_simple_forward.1} parent=1 // pred_fallthru
      _
    // Predicated region
    $region10: #{cnn2d_simple_forward.1} parent=1 // pred_check
      _
    $region11: #{cnn2d_simple_forward.1} parent=1 // pred_check_branch
      %30 = sbr.rel (0) target = $region13
    $region12: #{cnn2d_simple_forward.1} parent=1 // pred_region
      _
    $region13: #{cnn2d_simple_forward.1} parent=1 // pred_fallthru
      _
    // Predicated region
    $region14: #{cnn2d_simple_forward.1} parent=1 // pred_check
      _
    $region15: #{cnn2d_simple_forward.1} parent=1 // pred_check_branch
      %32 = sbr.rel (0) target = $region17
    $region16: #{cnn2d_simple_forward.1} parent=1 // pred_region
      _
    $region17: #{cnn2d_simple_forward.1} parent=1 // pred_fallthru
      _
    // Predicated region
    $region18: #{cnn2d_simple_forward.1} parent=1 // pred_check
      _
    $region19: #{cnn2d_simple_forward.1} parent=1 // pred_check_branch
      %34 = sbr.rel (0) target = $region21
    $region20: #{cnn2d_simple_forward.1} parent=1 // pred_region
      _
    $region21: #{cnn2d_simple_forward.1} parent=1 // pred_fallthru
      _
    // Predicated region
    $region22: #{cnn2d_simple_forward.1} parent=1 // pred_check
      _
    $region23: #{cnn2d_simple_forward.1} parent=1 // pred_check_branch
      %36 = sbr.rel (0) target = $region25
    $region24: #{cnn2d_simple_forward.1} parent=1 // pred_region
      _
    $region25: #{cnn2d_simple_forward.1} parent=1 // pred_fallthru
      _
    // Predicated region
    $region26: #{cnn2d_simple_forward.1} parent=1 // pred_check
      _
    $region27: #{cnn2d_simple_forward.1} parent=1 // pred_check_branch
      %38 = sbr.rel (0) target = $region29
    $region28: #{cnn2d_simple_forward.1} parent=1 // pred_region
      _
    $region29: #{cnn2d_simple_forward.1} parent=1 // pred_fallthru
      _
    // Predicated region
    $region30: #{cnn2d_simple_forward.1} parent=1 // pred_check
      _
    $region31: #{cnn2d_simple_forward.1} parent=1 // pred_check_branch
      %40 = sbr.rel (0) target = $region33
    $region32: #{cnn2d_simple_forward.1} parent=1 // pred_region
      _
    $region33: #{cnn2d_simple_forward.1} parent=1 // pred_fallthru
      _
    // Predicated region
    $region34: #{cnn2d_simple_forward.1} parent=1 // pred_check
      _
    $region35: #{cnn2d_simple_forward.1} parent=1 // pred_check_branch
      %42 = sbr.rel (0) target = $region37
    $region36: #{cnn2d_simple_forward.1} parent=1 // pred_region
      _
    $region37: #{cnn2d_simple_forward.1} parent=1 // pred_fallthru
      _
    // Predicated region
    $region38: #{cnn2d_simple_forward.1} parent=1 // pred_check
      _
    $region39: #{cnn2d_simple_forward.1} parent=1 // pred_check_branch
      %44 = sbr.rel (0) target = $region41
    $region40: #{cnn2d_simple_forward.1} parent=1 // pred_region
      %45 = dma.done [#allocation3], 16384
    $region41: #{cnn2d_simple_forward.1} parent=1 // pred_fallthru
      _
    %v47 = vld [vmem:[%s0] sm:$0xff]
    %v48 = vld [vmem:[%s0 + $0x8] sm:$0xff]
    %v49 = vld [vmem:[%s0 + $0x10] sm:$0xff]
    %v50 = vld [vmem:[%s0 + $0x18] sm:$0xff]
    %v51 = vld [vmem:[#allocation2] sm:$0xff]
    %v52 = vld [vmem:[#allocation2 + $0x8] sm:$0xff]
    %v53 = vld [vmem:[#allocation2 + $0x10] sm:$0xff]
    %v54 = vld [vmem:[#allocation2 + $0x18] sm:$0xff]
    %v55 = vld [vmem:[#allocation2 + $0x20] sm:$0xff]
    %v56 = vld [vmem:[#allocation2 + $0x28] sm:$0xff]
    %v57 = vld [vmem:[#allocation2 + $0x30] sm:$0xff]
    %v58 = vld [vmem:[#allocation2 + $0x38] sm:$0xff]
    %v59 = vld [vmem:[#allocation2 + $0x40] sm:$0xff]
    %v60 = vld [vmem:[#allocation2 + $0x48] sm:$0xff]
    %v61 = vld [vmem:[#allocation2 + $0x50] sm:$0xff]
    %v62 = vld [vmem:[#allocation2 + $0x58] sm:$0xff]
    %v63 = vld [vmem:[#allocation2 + $0x60] sm:$0xff]
    %v64 = vld [vmem:[#allocation2 + $0x68] sm:$0xff]
    %v65 = vld [vmem:[#allocation2 + $0x70] sm:$0xff]
    %v66 = vld [vmem:[#allocation2 + $0x78] sm:$0xff]
    %v67 = vld [vmem:[#allocation2 + $0x80] sm:$0xff]
    %v68 = vld [vmem:[#allocation2 + $0x88] sm:$0xff]
    %v69 = vld [vmem:[#allocation2 + $0x90] sm:$0xff]
    %v70 = vld [vmem:[#allocation2 + $0x98] sm:$0xff]
    %v71 = vld [vmem:[#allocation2 + $0xa0] sm:$0xff]
    %v72 = vld [vmem:[#allocation2 + $0xa8] sm:$0xff]
    %v73 = vld [vmem:[#allocation2 + $0xb0] sm:$0xff]
    %v74 = vld [vmem:[#allocation2 + $0xb8] sm:$0xff]
    %v75 = vld [vmem:[#allocation2 + $0xc0] sm:$0xff]
    %v76 = vld [vmem:[#allocation2 + $0xc8] sm:$0xff]
    %v77 = vld [vmem:[#allocation2 + $0xd0] sm:$0xff]
    %v78 = vld [vmem:[#allocation2 + $0xd8] sm:$0xff]
    %v79 = vld [vmem:[#allocation2 + $0xe0] sm:$0xff]
    %v80 = vld [vmem:[#allocation2 + $0xe8] sm:$0xff]
    %v81 = vld [vmem:[#allocation2 + $0xf0] sm:$0xff]
    %v82 = vld [vmem:[#allocation2 + $0xf8] sm:$0xff]
    %v83 = vld [vmem:[#allocation2 + $0x100] sm:$0xff]
    %v84 = vld [vmem:[#allocation2 + $0x108] sm:$0xff]
    %v85 = vld [vmem:[#allocation2 + $0x110] sm:$0xff]
    %v86 = vld [vmem:[#allocation2 + $0x118] sm:$0xff]
    %v87 = vld [vmem:[#allocation2 + $0x120] sm:$0xff]
    %v88 = vld [vmem:[#allocation2 + $0x128] sm:$0xff]
    %v89 = vld [vmem:[#allocation2 + $0x130] sm:$0xff]
    %v90 = vld [vmem:[#allocation2 + $0x138] sm:$0xff]
    %v91 = vld [vmem:[#allocation2 + $0x140] sm:$0xff]
    %v92 = vld [vmem:[#allocation2 + $0x148] sm:$0xff]
    %v93 = vld [vmem:[#allocation2 + $0x150] sm:$0xff]
    %v94 = vld [vmem:[#allocation2 + $0x158] sm:$0xff]
    %v95 = vld [vmem:[#allocation2 + $0x160] sm:$0xff]
    %v96 = vld [vmem:[#allocation2 + $0x168] sm:$0xff]
    %v97 = vld [vmem:[#allocation2 + $0x170] sm:$0xff]
    %v98 = vld [vmem:[#allocation2 + $0x178] sm:$0xff]
    %v99 = vld [vmem:[#allocation2 + $0x180] sm:$0xff]
    %v100 = vld [vmem:[#allocation2 + $0x188] sm:$0xff]
    %v101 = vld [vmem:[#allocation2 + $0x190] sm:$0xff]
    %v102 = vld [vmem:[#allocation2 + $0x198] sm:$0xff]
    %v103 = vld [vmem:[#allocation2 + $0x1a0] sm:$0xff]
    %v104 = vld [vmem:[#allocation2 + $0x1a8] sm:$0xff]
    %v105 = vld [vmem:[#allocation2 + $0x1b0] sm:$0xff]
    %v106 = vld [vmem:[#allocation2 + $0x1b8] sm:$0xff]
    %v107 = vld [vmem:[#allocation2 + $0x1c0] sm:$0xff]
    %v108 = vld [vmem:[#allocation2 + $0x1c8] sm:$0xff]
    %v109 = vld [vmem:[#allocation2 + $0x1d0] sm:$0xff]
    %v110 = vld [vmem:[#allocation2 + $0x1d8] sm:$0xff]
    %v111 = vld [vmem:[#allocation2 + $0x1e0] sm:$0xff]
    %v112 = vld [vmem:[#allocation2 + $0x1e8] sm:$0xff]
    %v113 = vld [vmem:[#allocation2 + $0x1f0] sm:$0xff]
    %v114 = vld [vmem:[#allocation2 + $0x1f8] sm:$0xff]
    %v115 = vld [vmem:[#allocation2 + $0x200] sm:$0xff]
    %v116 = vld [vmem:[#allocation2 + $0x208] sm:$0xff]
    %v117 = vld [vmem:[#allocation2 + $0x210] sm:$0xff]
    %v118 = vld [vmem:[#allocation2 + $0x218] sm:$0xff]
    %v119 = vld [vmem:[#allocation2 + $0x220] sm:$0xff]
    %v120 = vld [vmem:[#allocation2 + $0x228] sm:$0xff]
    %v121 = vld [vmem:[#allocation2 + $0x230] sm:$0xff]
    %v122 = vld [vmem:[#allocation2 + $0x238] sm:$0xff]
    %v123 = vld [vmem:[#allocation2 + $0x240] sm:$0xff]
    %v124 = vld [vmem:[#allocation2 + $0x248] sm:$0xff]
    %v125 = vld [vmem:[#allocation2 + $0x250] sm:$0xff]
    %v126 = vld [vmem:[#allocation2 + $0x258] sm:$0xff]
    %v127 = vld [vmem:[#allocation2 + $0x260] sm:$0xff]
    %v128 = vld [vmem:[#allocation2 + $0x268] sm:$0xff]
    %v129 = vld [vmem:[#allocation2 + $0x270] sm:$0xff]
    %v130 = vld [vmem:[#allocation2 + $0x278] sm:$0xff]
    %v131 = vld [vmem:[#allocation2 + $0x280] sm:$0xff]
    %v132 = vld [vmem:[#allocation2 + $0x288] sm:$0xff]
    %v133 = vld [vmem:[#allocation2 + $0x290] sm:$0xff]
    %v134 = vld [vmem:[#allocation2 + $0x298] sm:$0xff]
    %v135 = vld [vmem:[#allocation2 + $0x2a0] sm:$0xff]
    %v136 = vld [vmem:[#allocation2 + $0x2a8] sm:$0xff]
    %v137 = vld [vmem:[#allocation2 + $0x2b0] sm:$0xff]
    %v138 = vld [vmem:[#allocation2 + $0x2b8] sm:$0xff]
    %v139 = vld [vmem:[#allocation2 + $0x2c0] sm:$0xff]
    %v140 = vld [vmem:[#allocation2 + $0x2c8] sm:$0xff]
    %v141 = vld [vmem:[#allocation2 + $0x2d0] sm:$0xff]
    %v142 = vld [vmem:[#allocation2 + $0x2d8] sm:$0xff]
    %v143 = vld [vmem:[#allocation2 + $0x2e0] sm:$0xff]
    %v144 = vld [vmem:[#allocation2 + $0x2e8] sm:$0xff]
    %v145 = vld [vmem:[#allocation2 + $0x2f0] sm:$0xff]
    %v146 = vld [vmem:[#allocation2 + $0x2f8] sm:$0xff]
    %v147 = vld [vmem:[#allocation2 + $0x300] sm:$0xff]
    %v148 = vld [vmem:[#allocation2 + $0x308] sm:$0xff]
    %v149 = vld [vmem:[#allocation2 + $0x310] sm:$0xff]
    %v150 = vld [vmem:[#allocation2 + $0x318] sm:$0xff]
    %v151 = vld [vmem:[#allocation2 + $0x320] sm:$0xff]
    %v152 = vld [vmem:[#allocation2 + $0x328] sm:$0xff]
    %v153 = vld [vmem:[#allocation2 + $0x330] sm:$0xff]
    %v154 = vld [vmem:[#allocation2 + $0x338] sm:$0xff]
    %v155 = vld [vmem:[#allocation2 + $0x340] sm:$0xff]
    %v156 = vld [vmem:[#allocation2 + $0x348] sm:$0xff]
    %v157 = vld [vmem:[#allocation2 + $0x350] sm:$0xff]
    %v158 = vld [vmem:[#allocation2 + $0x358] sm:$0xff]
    %v159 = vld [vmem:[#allocation2 + $0x360] sm:$0xff]
    %v160 = vld [vmem:[#allocation2 + $0x368] sm:$0xff]
    %v161 = vld [vmem:[#allocation2 + $0x370] sm:$0xff]
    %v162 = vld [vmem:[#allocation2 + $0x378] sm:$0xff]
    %v163 = vld [vmem:[#allocation2 + $0x380] sm:$0xff]
    %v164 = vld [vmem:[#allocation2 + $0x388] sm:$0xff]
    %v165 = vld [vmem:[#allocation2 + $0x390] sm:$0xff]
    %v166 = vld [vmem:[#allocation2 + $0x398] sm:$0xff]
    %v167 = vld [vmem:[#allocation2 + $0x3a0] sm:$0xff]
    %v168 = vld [vmem:[#allocation2 + $0x3a8] sm:$0xff]
    %v169 = vld [vmem:[#allocation2 + $0x3b0] sm:$0xff]
    %v170 = vld [vmem:[#allocation2 + $0x3b8] sm:$0xff]
    %v171 = vld [vmem:[#allocation2 + $0x3c0] sm:$0xff]
    %v172 = vld [vmem:[#allocation2 + $0x3c8] sm:$0xff]
    %v173 = vld [vmem:[#allocation2 + $0x3d0] sm:$0xff]
    %v174 = vld [vmem:[#allocation2 + $0x3d8] sm:$0xff]
    %v175 = vld [vmem:[#allocation2 + $0x3e0] sm:$0xff]
    %v176 = vld [vmem:[#allocation2 + $0x3e8] sm:$0xff]
    %v177 = vld [vmem:[#allocation2 + $0x3f0] sm:$0xff]
    %v178 = vld [vmem:[#allocation2 + $0x3f8] sm:$0xff]
    %v179 = vld [vmem:[%s2] sm:$0x3]
    %v181 = vlaneseq
    %v182 = vshrl.u32 %v181, 7
    %v183 = vsub.s32 0, %v182
    %v184 = vrot.slane %v179, %v183
    %v185 = vlaneseq
    %v186 = vshrl.u32 %v185, 7
    %v187 = vsub.s32 1, %v186
    %v188 = vrot.slane %v179, %v187
    %v195 = vunpack.c.l.b16 %v47
    %v196 = vunpack.c.h.b16 %v47
    %v197 = vunpack.c.l.b16 %v48
    %v198 = vunpack.c.h.b16 %v48
    %v199 = vunpack.c.l.b16 %v49
    %v200 = vunpack.c.h.b16 %v49
    %v201 = vunpack.c.l.b16 %v50
    %v202 = vunpack.c.h.b16 %v50
    %v203 = vpack.c.b16 %v195, %v195
    %v204 = vpack.c.b16 %v196, %v196
    %v205 = vpack.c.b16 %v197, %v197
    %v206 = vpack.c.b16 %v198, %v198
    %v207 = vpack.c.b16 %v199, %v199
    %v208 = vpack.c.b16 %v200, %v200
    %v209 = vpack.c.b16 %v201, %v201
    %v210 = vpack.c.b16 %v202, %v202
    %v347 = vunpack.c.l.b16 %v51
    %v348 = vunpack.c.h.b16 %v51
    %v349 = vunpack.c.l.b16 %v52
    %v350 = vunpack.c.h.b16 %v52
    %v351 = vunpack.c.l.b16 %v53
    %v352 = vunpack.c.h.b16 %v53
    %v353 = vunpack.c.l.b16 %v54
    %v354 = vunpack.c.h.b16 %v54
    %v355 = vunpack.c.l.b16 %v55
    %v356 = vunpack.c.h.b16 %v55
    %v357 = vunpack.c.l.b16 %v56
    %v358 = vunpack.c.h.b16 %v56
    %v359 = vunpack.c.l.b16 %v57
    %v360 = vunpack.c.h.b16 %v57
    %v361 = vunpack.c.l.b16 %v58
    %v362 = vunpack.c.h.b16 %v58
    %v363 = vunpack.c.l.b16 %v59
    %v364 = vunpack.c.h.b16 %v59
    %v365 = vunpack.c.l.b16 %v60
    %v366 = vunpack.c.h.b16 %v60
    %v367 = vunpack.c.l.b16 %v61
    %v368 = vunpack.c.h.b16 %v61
    %v369 = vunpack.c.l.b16 %v62
    %v370 = vunpack.c.h.b16 %v62
    %v371 = vunpack.c.l.b16 %v63
    %v372 = vunpack.c.h.b16 %v63
    %v373 = vunpack.c.l.b16 %v64
    %v374 = vunpack.c.h.b16 %v64
    %v375 = vunpack.c.l.b16 %v65
    %v376 = vunpack.c.h.b16 %v65
    %v377 = vunpack.c.l.b16 %v66
    %v378 = vunpack.c.h.b16 %v66
    %v379 = vunpack.c.l.b16 %v67
    %v380 = vunpack.c.h.b16 %v67
    %v381 = vunpack.c.l.b16 %v68
    %v382 = vunpack.c.h.b16 %v68
    %v383 = vunpack.c.l.b16 %v69
    %v384 = vunpack.c.h.b16 %v69
    %v385 = vunpack.c.l.b16 %v70
    %v386 = vunpack.c.h.b16 %v70
    %v387 = vunpack.c.l.b16 %v71
    %v388 = vunpack.c.h.b16 %v71
    %v389 = vunpack.c.l.b16 %v72
    %v390 = vunpack.c.h.b16 %v72
    %v391 = vunpack.c.l.b16 %v73
    %v392 = vunpack.c.h.b16 %v73
    %v393 = vunpack.c.l.b16 %v74
    %v394 = vunpack.c.h.b16 %v74
    %v395 = vunpack.c.l.b16 %v75
    %v396 = vunpack.c.h.b16 %v75
    %v397 = vunpack.c.l.b16 %v76
    %v398 = vunpack.c.h.b16 %v76
    %v399 = vunpack.c.l.b16 %v77
    %v400 = vunpack.c.h.b16 %v77
    %v401 = vunpack.c.l.b16 %v78
    %v402 = vunpack.c.h.b16 %v78
    %v403 = vunpack.c.l.b16 %v79
    %v404 = vunpack.c.h.b16 %v79
    %v405 = vunpack.c.l.b16 %v80
    %v406 = vunpack.c.h.b16 %v80
    %v407 = vunpack.c.l.b16 %v81
    %v408 = vunpack.c.h.b16 %v81
    %v409 = vunpack.c.l.b16 %v82
    %v410 = vunpack.c.h.b16 %v82
    %v411 = vunpack.c.l.b16 %v83
    %v412 = vunpack.c.h.b16 %v83
    %v413 = vunpack.c.l.b16 %v84
    %v414 = vunpack.c.h.b16 %v84
    %v415 = vunpack.c.l.b16 %v85
    %v416 = vunpack.c.h.b16 %v85
    %v417 = vunpack.c.l.b16 %v86
    %v418 = vunpack.c.h.b16 %v86
    %v419 = vunpack.c.l.b16 %v87
    %v420 = vunpack.c.h.b16 %v87
    %v421 = vunpack.c.l.b16 %v88
    %v422 = vunpack.c.h.b16 %v88
    %v423 = vunpack.c.l.b16 %v89
    %v424 = vunpack.c.h.b16 %v89
    %v425 = vunpack.c.l.b16 %v90
    %v426 = vunpack.c.h.b16 %v90
    %v427 = vunpack.c.l.b16 %v91
    %v428 = vunpack.c.h.b16 %v91
    %v429 = vunpack.c.l.b16 %v92
    %v430 = vunpack.c.h.b16 %v92
    %v431 = vunpack.c.l.b16 %v93
    %v432 = vunpack.c.h.b16 %v93
    %v433 = vunpack.c.l.b16 %v94
    %v434 = vunpack.c.h.b16 %v94
    %v435 = vunpack.c.l.b16 %v95
    %v436 = vunpack.c.h.b16 %v95
    %v437 = vunpack.c.l.b16 %v96
    %v438 = vunpack.c.h.b16 %v96
    %v439 = vunpack.c.l.b16 %v97
    %v440 = vunpack.c.h.b16 %v97
    %v441 = vunpack.c.l.b16 %v98
    %v442 = vunpack.c.h.b16 %v98
    %v443 = vunpack.c.l.b16 %v99
    %v444 = vunpack.c.h.b16 %v99
    %v445 = vunpack.c.l.b16 %v100
    %v446 = vunpack.c.h.b16 %v100
    %v447 = vunpack.c.l.b16 %v101
    %v448 = vunpack.c.h.b16 %v101
    %v449 = vunpack.c.l.b16 %v102
    %v450 = vunpack.c.h.b16 %v102
    %v451 = vunpack.c.l.b16 %v103
    %v452 = vunpack.c.h.b16 %v103
    %v453 = vunpack.c.l.b16 %v104
    %v454 = vunpack.c.h.b16 %v104
    %v455 = vunpack.c.l.b16 %v105
    %v456 = vunpack.c.h.b16 %v105
    %v457 = vunpack.c.l.b16 %v106
    %v458 = vunpack.c.h.b16 %v106
    %v459 = vunpack.c.l.b16 %v107
    %v460 = vunpack.c.h.b16 %v107
    %v461 = vunpack.c.l.b16 %v108
    %v462 = vunpack.c.h.b16 %v108
    %v463 = vunpack.c.l.b16 %v109
    %v464 = vunpack.c.h.b16 %v109
    %v465 = vunpack.c.l.b16 %v110
    %v466 = vunpack.c.h.b16 %v110
    %v467 = vunpack.c.l.b16 %v111
    %v468 = vunpack.c.h.b16 %v111
    %v469 = vunpack.c.l.b16 %v112
    %v470 = vunpack.c.h.b16 %v112
    %v471 = vunpack.c.l.b16 %v113
    %v472 = vunpack.c.h.b16 %v113
    %v473 = vunpack.c.l.b16 %v114
    %v474 = vunpack.c.h.b16 %v114
    %v475 = vunpack.c.l.b16 %v115
    %v476 = vunpack.c.h.b16 %v115
    %v477 = vunpack.c.l.b16 %v116
    %v478 = vunpack.c.h.b16 %v116
    %v479 = vunpack.c.l.b16 %v117
    %v480 = vunpack.c.h.b16 %v117
    %v481 = vunpack.c.l.b16 %v118
    %v482 = vunpack.c.h.b16 %v118
    %v483 = vunpack.c.l.b16 %v119
    %v484 = vunpack.c.h.b16 %v119
    %v485 = vunpack.c.l.b16 %v120
    %v486 = vunpack.c.h.b16 %v120
    %v487 = vunpack.c.l.b16 %v121
    %v488 = vunpack.c.h.b16 %v121
    %v489 = vunpack.c.l.b16 %v122
    %v490 = vunpack.c.h.b16 %v122
    %v491 = vunpack.c.l.b16 %v123
    %v492 = vunpack.c.h.b16 %v123
    %v493 = vunpack.c.l.b16 %v124
    %v494 = vunpack.c.h.b16 %v124
    %v495 = vunpack.c.l.b16 %v125
    %v496 = vunpack.c.h.b16 %v125
    %v497 = vunpack.c.l.b16 %v126
    %v498 = vunpack.c.h.b16 %v126
    %v499 = vunpack.c.l.b16 %v127
    %v500 = vunpack.c.h.b16 %v127
    %v501 = vunpack.c.l.b16 %v128
    %v502 = vunpack.c.h.b16 %v128
    %v503 = vunpack.c.l.b16 %v129
    %v504 = vunpack.c.h.b16 %v129
    %v505 = vunpack.c.l.b16 %v130
    %v506 = vunpack.c.h.b16 %v130
    %v507 = vunpack.c.l.b16 %v131
    %v508 = vunpack.c.h.b16 %v131
    %v509 = vunpack.c.l.b16 %v132
    %v510 = vunpack.c.h.b16 %v132
    %v511 = vunpack.c.l.b16 %v133
    %v512 = vunpack.c.h.b16 %v133
    %v513 = vunpack.c.l.b16 %v134
    %v514 = vunpack.c.h.b16 %v134
    %v515 = vunpack.c.l.b16 %v135
    %v516 = vunpack.c.h.b16 %v135
    %v517 = vunpack.c.l.b16 %v136
    %v518 = vunpack.c.h.b16 %v136
    %v519 = vunpack.c.l.b16 %v137
    %v520 = vunpack.c.h.b16 %v137
    %v521 = vunpack.c.l.b16 %v138
    %v522 = vunpack.c.h.b16 %v138
    %v523 = vunpack.c.l.b16 %v139
    %v524 = vunpack.c.h.b16 %v139
    %v525 = vunpack.c.l.b16 %v140
    %v526 = vunpack.c.h.b16 %v140
    %v527 = vunpack.c.l.b16 %v141
    %v528 = vunpack.c.h.b16 %v141
    %v529 = vunpack.c.l.b16 %v142
    %v530 = vunpack.c.h.b16 %v142
    %v531 = vunpack.c.l.b16 %v143
    %v532 = vunpack.c.h.b16 %v143
    %v533 = vunpack.c.l.b16 %v144
    %v534 = vunpack.c.h.b16 %v144
    %v535 = vunpack.c.l.b16 %v145
    %v536 = vunpack.c.h.b16 %v145
    %v537 = vunpack.c.l.b16 %v146
    %v538 = vunpack.c.h.b16 %v146
    %v539 = vunpack.c.l.b16 %v147
    %v540 = vunpack.c.h.b16 %v147
    %v541 = vunpack.c.l.b16 %v148
    %v542 = vunpack.c.h.b16 %v148
    %v543 = vunpack.c.l.b16 %v149
    %v544 = vunpack.c.h.b16 %v149
    %v545 = vunpack.c.l.b16 %v150
    %v546 = vunpack.c.h.b16 %v150
    %v547 = vunpack.c.l.b16 %v151
    %v548 = vunpack.c.h.b16 %v151
    %v549 = vunpack.c.l.b16 %v152
    %v550 = vunpack.c.h.b16 %v152
    %v551 = vunpack.c.l.b16 %v153
    %v552 = vunpack.c.h.b16 %v153
    %v553 = vunpack.c.l.b16 %v154
    %v554 = vunpack.c.h.b16 %v154
    %v555 = vunpack.c.l.b16 %v155
    %v556 = vunpack.c.h.b16 %v155
    %v557 = vunpack.c.l.b16 %v156
    %v558 = vunpack.c.h.b16 %v156
    %v559 = vunpack.c.l.b16 %v157
    %v560 = vunpack.c.h.b16 %v157
    %v561 = vunpack.c.l.b16 %v158
    %v562 = vunpack.c.h.b16 %v158
    %v563 = vunpack.c.l.b16 %v159
    %v564 = vunpack.c.h.b16 %v159
    %v565 = vunpack.c.l.b16 %v160
    %v566 = vunpack.c.h.b16 %v160
    %v567 = vunpack.c.l.b16 %v161
    %v568 = vunpack.c.h.b16 %v161
    %v569 = vunpack.c.l.b16 %v162
    %v570 = vunpack.c.h.b16 %v162
    %v571 = vunpack.c.l.b16 %v163
    %v572 = vunpack.c.h.b16 %v163
    %v573 = vunpack.c.l.b16 %v164
    %v574 = vunpack.c.h.b16 %v164
    %v575 = vunpack.c.l.b16 %v165
    %v576 = vunpack.c.h.b16 %v165
    %v577 = vunpack.c.l.b16 %v166
    %v578 = vunpack.c.h.b16 %v166
    %v579 = vunpack.c.l.b16 %v167
    %v580 = vunpack.c.h.b16 %v167
    %v581 = vunpack.c.l.b16 %v168
    %v582 = vunpack.c.h.b16 %v168
    %v583 = vunpack.c.l.b16 %v169
    %v584 = vunpack.c.h.b16 %v169
    %v585 = vunpack.c.l.b16 %v170
    %v586 = vunpack.c.h.b16 %v170
    %v587 = vunpack.c.l.b16 %v171
    %v588 = vunpack.c.h.b16 %v171
    %v589 = vunpack.c.l.b16 %v172
    %v590 = vunpack.c.h.b16 %v172
    %v591 = vunpack.c.l.b16 %v173
    %v592 = vunpack.c.h.b16 %v173
    %v593 = vunpack.c.l.b16 %v174
    %v594 = vunpack.c.h.b16 %v174
    %v595 = vunpack.c.l.b16 %v175
    %v596 = vunpack.c.h.b16 %v175
    %v597 = vunpack.c.l.b16 %v176
    %v598 = vunpack.c.h.b16 %v176
    %v599 = vunpack.c.l.b16 %v177
    %v600 = vunpack.c.h.b16 %v177
    %v601 = vunpack.c.l.b16 %v178
    %v602 = vunpack.c.h.b16 %v178
    %v603 = vpack.c.b16 %v349, %v347
    %v604 = vpack.c.b16 %v350, %v348
    %v605 = vpack.c.b16 %v353, %v351
    %v606 = vpack.c.b16 %v354, %v352
    %v607 = vpack.c.b16 %v357, %v355
    %v608 = vpack.c.b16 %v358, %v356
    %v609 = vpack.c.b16 %v361, %v359
    %v610 = vpack.c.b16 %v362, %v360
    %v611 = vpack.c.b16 %v365, %v363
    %v612 = vpack.c.b16 %v366, %v364
    %v613 = vpack.c.b16 %v369, %v367
    %v614 = vpack.c.b16 %v370, %v368
    %v615 = vpack.c.b16 %v373, %v371
    %v616 = vpack.c.b16 %v374, %v372
    %v617 = vpack.c.b16 %v377, %v375
    %v618 = vpack.c.b16 %v378, %v376
    %v619 = vpack.c.b16 %v381, %v379
    %v620 = vpack.c.b16 %v382, %v380
    %v621 = vpack.c.b16 %v385, %v383
    %v622 = vpack.c.b16 %v386, %v384
    %v623 = vpack.c.b16 %v389, %v387
    %v624 = vpack.c.b16 %v390, %v388
    %v625 = vpack.c.b16 %v393, %v391
    %v626 = vpack.c.b16 %v394, %v392
    %v627 = vpack.c.b16 %v397, %v395
    %v628 = vpack.c.b16 %v398, %v396
    %v629 = vpack.c.b16 %v401, %v399
    %v630 = vpack.c.b16 %v402, %v400
    %v631 = vpack.c.b16 %v405, %v403
    %v632 = vpack.c.b16 %v406, %v404
    %v633 = vpack.c.b16 %v409, %v407
    %v634 = vpack.c.b16 %v410, %v408
    %v635 = vpack.c.b16 %v413, %v411
    %v636 = vpack.c.b16 %v414, %v412
    %v637 = vpack.c.b16 %v417, %v415
    %v638 = vpack.c.b16 %v418, %v416
    %v639 = vpack.c.b16 %v421, %v419
    %v640 = vpack.c.b16 %v422, %v420
    %v641 = vpack.c.b16 %v425, %v423
    %v642 = vpack.c.b16 %v426, %v424
    %v643 = vpack.c.b16 %v429, %v427
    %v644 = vpack.c.b16 %v430, %v428
    %v645 = vpack.c.b16 %v433, %v431
    %v646 = vpack.c.b16 %v434, %v432
    %v647 = vpack.c.b16 %v437, %v435
    %v648 = vpack.c.b16 %v438, %v436
    %v649 = vpack.c.b16 %v441, %v439
    %v650 = vpack.c.b16 %v442, %v440
    %v651 = vpack.c.b16 %v445, %v443
    %v652 = vpack.c.b16 %v446, %v444
    %v653 = vpack.c.b16 %v449, %v447
    %v654 = vpack.c.b16 %v450, %v448
    %v655 = vpack.c.b16 %v453, %v451
    %v656 = vpack.c.b16 %v454, %v452
    %v657 = vpack.c.b16 %v457, %v455
    %v658 = vpack.c.b16 %v458, %v456
    %v659 = vpack.c.b16 %v461, %v459
    %v660 = vpack.c.b16 %v462, %v460
    %v661 = vpack.c.b16 %v465, %v463
    %v662 = vpack.c.b16 %v466, %v464
    %v663 = vpack.c.b16 %v469, %v467
    %v664 = vpack.c.b16 %v470, %v468
    %v665 = vpack.c.b16 %v473, %v471
    %v666 = vpack.c.b16 %v474, %v472
    %v667 = vpack.c.b16 %v477, %v475
    %v668 = vpack.c.b16 %v478, %v476
    %v669 = vpack.c.b16 %v481, %v479
    %v670 = vpack.c.b16 %v482, %v480
    %v671 = vpack.c.b16 %v485, %v483
    %v672 = vpack.c.b16 %v486, %v484
    %v673 = vpack.c.b16 %v489, %v487
    %v674 = vpack.c.b16 %v490, %v488
    %v675 = vpack.c.b16 %v493, %v491
    %v676 = vpack.c.b16 %v494, %v492
    %v677 = vpack.c.b16 %v497, %v495
    %v678 = vpack.c.b16 %v498, %v496
    %v679 = vpack.c.b16 %v501, %v499
    %v680 = vpack.c.b16 %v502, %v500
    %v681 = vpack.c.b16 %v505, %v503
    %v682 = vpack.c.b16 %v506, %v504
    %v683 = vpack.c.b16 %v509, %v507
    %v684 = vpack.c.b16 %v510, %v508
    %v685 = vpack.c.b16 %v513, %v511
    %v686 = vpack.c.b16 %v514, %v512
    %v687 = vpack.c.b16 %v517, %v515
    %v688 = vpack.c.b16 %v518, %v516
    %v689 = vpack.c.b16 %v521, %v519
    %v690 = vpack.c.b16 %v522, %v520
    %v691 = vpack.c.b16 %v525, %v523
    %v692 = vpack.c.b16 %v526, %v524
    %v693 = vpack.c.b16 %v529, %v527
    %v694 = vpack.c.b16 %v530, %v528
    %v695 = vpack.c.b16 %v533, %v531
    %v696 = vpack.c.b16 %v534, %v532
    %v697 = vpack.c.b16 %v537, %v535
    %v698 = vpack.c.b16 %v538, %v536
    %v699 = vpack.c.b16 %v541, %v539
    %v700 = vpack.c.b16 %v542, %v540
    %v701 = vpack.c.b16 %v545, %v543
    %v702 = vpack.c.b16 %v546, %v544
    %v703 = vpack.c.b16 %v549, %v547
    %v704 = vpack.c.b16 %v550, %v548
    %v705 = vpack.c.b16 %v553, %v551
    %v706 = vpack.c.b16 %v554, %v552
    %v707 = vpack.c.b16 %v557, %v555
    %v708 = vpack.c.b16 %v558, %v556
    %v709 = vpack.c.b16 %v561, %v559
    %v710 = vpack.c.b16 %v562, %v560
    %v711 = vpack.c.b16 %v565, %v563
    %v712 = vpack.c.b16 %v566, %v564
    %v713 = vpack.c.b16 %v569, %v567
    %v714 = vpack.c.b16 %v570, %v568
    %v715 = vpack.c.b16 %v573, %v571
    %v716 = vpack.c.b16 %v574, %v572
    %v717 = vpack.c.b16 %v577, %v575
    %v718 = vpack.c.b16 %v578, %v576
    %v719 = vpack.c.b16 %v581, %v579
    %v720 = vpack.c.b16 %v582, %v580
    %v721 = vpack.c.b16 %v585, %v583
    %v722 = vpack.c.b16 %v586, %v584
    %v723 = vpack.c.b16 %v589, %v587
    %v724 = vpack.c.b16 %v590, %v588
    %v725 = vpack.c.b16 %v593, %v591
    %v726 = vpack.c.b16 %v594, %v592
    %v727 = vpack.c.b16 %v597, %v595
    %v728 = vpack.c.b16 %v598, %v596
    %v729 = vpack.c.b16 %v601, %v599
    %v730 = vpack.c.b16 %v602, %v600
    %859 = vmatprep.subr.bf16.mxu0 %v604
    %860 = vmatpush1.bf16.msra.mxu0 %v603
    %861 = vmatprep.subr.bf16.mxu0 %v606
    %862 = vmatpush1.bf16.msra.mxu0 %v605
    %863 = vmatprep.subr.bf16.mxu0 %v608
    %864 = vmatpush1.bf16.msra.mxu0 %v607
    %865 = vmatprep.subr.bf16.mxu0 %v610
    %866 = vmatpush1.bf16.msra.mxu0 %v609
    %867 = vmatprep.subr.bf16.mxu0 %v612
    %868 = vmatpush1.bf16.msra.mxu0 %v611
    %869 = vmatprep.subr.bf16.mxu0 %v614
    %870 = vmatpush1.bf16.msra.mxu0 %v613
    %871 = vmatprep.subr.bf16.mxu0 %v616
    %872 = vmatpush1.bf16.msra.mxu0 %v615
    %873 = vmatprep.subr.bf16.mxu0 %v618
    %874 = vmatpush1.bf16.msra.mxu0 %v617
    %875 = vmatprep.subr.bf16.mxu0 %v620
    %876 = vmatpush1.bf16.msra.mxu0 %v619
    %877 = vmatprep.subr.bf16.mxu0 %v622
    %878 = vmatpush1.bf16.msra.mxu0 %v621
    %879 = vmatprep.subr.bf16.mxu0 %v624
    %880 = vmatpush1.bf16.msra.mxu0 %v623
    %881 = vmatprep.subr.bf16.mxu0 %v626
    %882 = vmatpush1.bf16.msra.mxu0 %v625
    %883 = vmatprep.subr.bf16.mxu0 %v628
    %884 = vmatpush1.bf16.msra.mxu0 %v627
    %885 = vmatprep.subr.bf16.mxu0 %v630
    %886 = vmatpush1.bf16.msra.mxu0 %v629
    %887 = vmatprep.subr.bf16.mxu0 %v632
    %888 = vmatpush1.bf16.msra.mxu0 %v631
    %889 = vmatprep.subr.bf16.mxu0 %v634
    %890 = vmatpush1.bf16.msra.mxu0 %v633
    %891 = vmatprep.mubr.bf16.mxu0 %v204
    %892 = vmatmul.mubr.bf16.gmra.mrb[0].mxu0 %v203
    %v893 = vpop.f32.mrb[0].mxu0
    %v894 = vadd.f32 %v184, %v893
    %v895 = vpop.f32.mrb[0].mxu0
    %v896 = vadd.f32 %v188, %v895
    %v897 = vpop.f32.mrb[0].mxu0
    %v898 = vpop.f32.mrb[0].mxu0
    %899 = vdwg.mxu0
    %900 = vmatprep.subr.bf16.mxu0 %v636
    %901 = vmatpush1.bf16.msra.mxu0 %v635
    %902 = vmatprep.subr.bf16.mxu0 %v638
    %903 = vmatpush1.bf16.msra.mxu0 %v637
    %904 = vmatprep.subr.bf16.mxu0 %v640
    %905 = vmatpush1.bf16.msra.mxu0 %v639
    %906 = vmatprep.subr.bf16.mxu0 %v642
    %907 = vmatpush1.bf16.msra.mxu0 %v641
    %908 = vmatprep.subr.bf16.mxu0 %v644
    %909 = vmatpush1.bf16.msra.mxu0 %v643
    %910 = vmatprep.subr.bf16.mxu0 %v646
    %911 = vmatpush1.bf16.msra.mxu0 %v645
    %912 = vmatprep.subr.bf16.mxu0 %v648
    %913 = vmatpush1.bf16.msra.mxu0 %v647
    %914 = vmatprep.subr.bf16.mxu0 %v650
    %915 = vmatpush1.bf16.msra.mxu0 %v649
    %916 = vmatprep.subr.bf16.mxu0 %v652
    %917 = vmatpush1.bf16.msra.mxu0 %v651
    %918 = vmatprep.subr.bf16.mxu0 %v654
    %919 = vmatpush1.bf16.msra.mxu0 %v653
    %920 = vmatprep.subr.bf16.mxu0 %v656
    %921 = vmatpush1.bf16.msra.mxu0 %v655
    %922 = vmatprep.subr.bf16.mxu0 %v658
    %923 = vmatpush1.bf16.msra.mxu0 %v657
    %924 = vmatprep.subr.bf16.mxu0 %v660
    %925 = vmatpush1.bf16.msra.mxu0 %v659
    %926 = vmatprep.subr.bf16.mxu0 %v662
    %927 = vmatpush1.bf16.msra.mxu0 %v661
    %928 = vmatprep.subr.bf16.mxu0 %v664
    %929 = vmatpush1.bf16.msra.mxu0 %v663
    %930 = vmatprep.subr.bf16.mxu0 %v666
    %931 = vmatpush1.bf16.msra.mxu0 %v665
    %932 = vmatprep.mubr.bf16.mxu0 %v206
    %933 = vmatmul.mubr.bf16.gmra.mrb[0].mxu0 %v205
    %v934 = vpop.f32.mrb[0].mxu0
    %v935 = vadd.f32 %v894, %v934
    %v936 = vpop.f32.mrb[0].mxu0
    %v937 = vadd.f32 %v896, %v936
    %v938 = vpop.f32.mrb[0].mxu0
    %v939 = vpop.f32.mrb[0].mxu0
    %940 = vdwg.mxu0
    %941 = vmatprep.subr.bf16.mxu0 %v668
    %942 = vmatpush1.bf16.msra.mxu0 %v667
    %943 = vmatprep.subr.bf16.mxu0 %v670
    %944 = vmatpush1.bf16.msra.mxu0 %v669
    %945 = vmatprep.subr.bf16.mxu0 %v672
    %946 = vmatpush1.bf16.msra.mxu0 %v671
    %947 = vmatprep.subr.bf16.mxu0 %v674
    %948 = vmatpush1.bf16.msra.mxu0 %v673
    %949 = vmatprep.subr.bf16.mxu0 %v676
    %950 = vmatpush1.bf16.msra.mxu0 %v675
    %951 = vmatprep.subr.bf16.mxu0 %v678
    %952 = vmatpush1.bf16.msra.mxu0 %v677
    %953 = vmatprep.subr.bf16.mxu0 %v680
    %954 = vmatpush1.bf16.msra.mxu0 %v679
    %955 = vmatprep.subr.bf16.mxu0 %v682
    %956 = vmatpush1.bf16.msra.mxu0 %v681
    %957 = vmatprep.subr.bf16.mxu0 %v684
    %958 = vmatpush1.bf16.msra.mxu0 %v683
    %959 = vmatprep.subr.bf16.mxu0 %v686
    %960 = vmatpush1.bf16.msra.mxu0 %v685
    %961 = vmatprep.subr.bf16.mxu0 %v688
    %962 = vmatpush1.bf16.msra.mxu0 %v687
    %963 = vmatprep.subr.bf16.mxu0 %v690
    %964 = vmatpush1.bf16.msra.mxu0 %v689
    %965 = vmatprep.subr.bf16.mxu0 %v692
    %966 = vmatpush1.bf16.msra.mxu0 %v691
    %967 = vmatprep.subr.bf16.mxu0 %v694
    %968 = vmatpush1.bf16.msra.mxu0 %v693
    %969 = vmatprep.subr.bf16.mxu0 %v696
    %970 = vmatpush1.bf16.msra.mxu0 %v695
    %971 = vmatprep.subr.bf16.mxu0 %v698
    %972 = vmatpush1.bf16.msra.mxu0 %v697
    %973 = vmatprep.mubr.bf16.mxu0 %v208
    %974 = vmatmul.mubr.bf16.gmra.mrb[0].mxu0 %v207
    %v975 = vpop.f32.mrb[0].mxu0
    %v976 = vadd.f32 %v935, %v975
    %v977 = vpop.f32.mrb[0].mxu0
    %v978 = vadd.f32 %v937, %v977
    %v979 = vpop.f32.mrb[0].mxu0
    %v980 = vpop.f32.mrb[0].mxu0
    %981 = vdwg.mxu0
    %982 = vmatprep.subr.bf16.mxu0 %v700
    %983 = vmatpush1.bf16.msra.mxu0 %v699
    %984 = vmatprep.subr.bf16.mxu0 %v702
    %985 = vmatpush1.bf16.msra.mxu0 %v701
    %986 = vmatprep.subr.bf16.mxu0 %v704
    %987 = vmatpush1.bf16.msra.mxu0 %v703
    %988 = vmatprep.subr.bf16.mxu0 %v706
    %989 = vmatpush1.bf16.msra.mxu0 %v705
    %990 = vmatprep.subr.bf16.mxu0 %v708
    %991 = vmatpush1.bf16.msra.mxu0 %v707
    %992 = vmatprep.subr.bf16.mxu0 %v710
    %993 = vmatpush1.bf16.msra.mxu0 %v709
    %994 = vmatprep.subr.bf16.mxu0 %v712
    %995 = vmatpush1.bf16.msra.mxu0 %v711
    %996 = vmatprep.subr.bf16.mxu0 %v714
    %997 = vmatpush1.bf16.msra.mxu0 %v713
    %998 = vmatprep.subr.bf16.mxu0 %v716
    %999 = vmatpush1.bf16.msra.mxu0 %v715
    %1000 = vmatprep.subr.bf16.mxu0 %v718
    %1001 = vmatpush1.bf16.msra.mxu0 %v717
    %1002 = vmatprep.subr.bf16.mxu0 %v720
    %1003 = vmatpush1.bf16.msra.mxu0 %v719
    %1004 = vmatprep.subr.bf16.mxu0 %v722
    %1005 = vmatpush1.bf16.msra.mxu0 %v721
    %1006 = vmatprep.subr.bf16.mxu0 %v724
    %1007 = vmatpush1.bf16.msra.mxu0 %v723
    %1008 = vmatprep.subr.bf16.mxu0 %v726
    %1009 = vmatpush1.bf16.msra.mxu0 %v725
    %1010 = vmatprep.subr.bf16.mxu0 %v728
    %1011 = vmatpush1.bf16.msra.mxu0 %v727
    %1012 = vmatprep.subr.bf16.mxu0 %v730
    %1013 = vmatpush1.bf16.msra.mxu0 %v729
    %1014 = vmatprep.mubr.bf16.mxu0 %v210
    %1015 = vmatmul.mubr.bf16.gmra.mrb[0].mxu0 %v209
    %v1016 = vpop.f32.mrb[0].mxu0
    %v1017 = vadd.f32 %v976, %v1016
    %v1018 = vpop.f32.mrb[0].mxu0
    %v1019 = vadd.f32 %v978, %v1018
    %v1020 = vpop.f32.mrb[0].mxu0
    %v1021 = vpop.f32.mrb[0].mxu0
    %1022 = vdwg.mxu0
    %v1023 = vmax.f32 %v1017, 0.0
    %v1024 = vmax.f32 %v1019, 0.0
    %v1025 = vpack.c.bf16 %v1023, %v1023
    %v1026 = vpack.c.bf16 %v1024, %v1024
    %v1027 = vld [vmem:[%s3] sm:$0xf]
    %v1028 = vld [vmem:[%s3 + $0x4] sm:$0xf]
    %v1029 = vld [vmem:[%s3 + $0x8] sm:$0xf]
    %v1030 = vld [vmem:[%s3 + $0xc] sm:$0xf]
    %v1031 = vld [vmem:[%s3 + $0x10] sm:$0xf]
    %v1032 = vld [vmem:[%s3 + $0x14] sm:$0xf]
    %v1033 = vld [vmem:[%s3 + $0x18] sm:$0xf]
    %v1034 = vld [vmem:[%s3 + $0x1c] sm:$0xf]
    %v1035 = vld [vmem:[%s3 + $0x20] sm:$0xf]
    %v1036 = vld [vmem:[%s3 + $0x24] sm:$0xf]
    %v1037 = vld [vmem:[%s3 + $0x28] sm:$0xf]
    %v1038 = vld [vmem:[%s3 + $0x2c] sm:$0xf]
    %v1039 = vld [vmem:[%s3 + $0x30] sm:$0xf]
    %v1040 = vld [vmem:[%s3 + $0x34] sm:$0xf]
    %v1041 = vld [vmem:[%s3 + $0x38] sm:$0xf]
    %v1042 = vld [vmem:[%s3 + $0x3c] sm:$0xf]
    %v1043 = vld [vmem:[%s3 + $0x40] sm:$0xf]
    %v1044 = vld [vmem:[%s3 + $0x44] sm:$0xf]
    %v1045 = vld [vmem:[%s3 + $0x48] sm:$0xf]
    %v1046 = vld [vmem:[%s3 + $0x4c] sm:$0xf]
    %v1047 = vld [vmem:[%s3 + $0x50] sm:$0xf]
    %v1048 = vld [vmem:[%s3 + $0x54] sm:$0xf]
    %v1049 = vld [vmem:[%s3 + $0x58] sm:$0xf]
    %v1050 = vld [vmem:[%s3 + $0x5c] sm:$0xf]
    %v1051 = vld [vmem:[%s3 + $0x60] sm:$0xf]
    %v1052 = vld [vmem:[%s3 + $0x64] sm:$0xf]
    %v1053 = vld [vmem:[%s3 + $0x68] sm:$0xf]
    %v1054 = vld [vmem:[%s3 + $0x6c] sm:$0xf]
    %v1055 = vld [vmem:[%s3 + $0x70] sm:$0xf]
    %v1056 = vld [vmem:[%s3 + $0x74] sm:$0xf]
    %v1057 = vld [vmem:[%s3 + $0x78] sm:$0xf]
    %v1058 = vld [vmem:[%s3 + $0x7c] sm:$0xf]
    %v1059 = vld [vmem:[%s4] sm:$0x1]
    %v1061 = vlaneseq
    %v1062 = vshrl.u32 %v1061, 7
    %v1063 = vsub.s32 0, %v1062
    %v1064 = vrot.slane %v1059, %v1063
    %v1098 = vunpack.c.l.b16 %v1027
    %v1099 = vunpack.c.l.b16 %v1028
    %v1100 = vunpack.c.l.b16 %v1029
    %v1101 = vunpack.c.l.b16 %v1030
    %v1102 = vunpack.c.l.b16 %v1031
    %v1103 = vunpack.c.l.b16 %v1032
    %v1104 = vunpack.c.l.b16 %v1033
    %v1105 = vunpack.c.l.b16 %v1034
    %v1106 = vunpack.c.l.b16 %v1035
    %v1107 = vunpack.c.l.b16 %v1036
    %v1108 = vunpack.c.l.b16 %v1037
    %v1109 = vunpack.c.l.b16 %v1038
    %v1110 = vunpack.c.l.b16 %v1039
    %v1111 = vunpack.c.l.b16 %v1040
    %v1112 = vunpack.c.l.b16 %v1041
    %v1113 = vunpack.c.l.b16 %v1042
    %v1114 = vunpack.c.l.b16 %v1043
    %v1115 = vunpack.c.l.b16 %v1044
    %v1116 = vunpack.c.l.b16 %v1045
    %v1117 = vunpack.c.l.b16 %v1046
    %v1118 = vunpack.c.l.b16 %v1047
    %v1119 = vunpack.c.l.b16 %v1048
    %v1120 = vunpack.c.l.b16 %v1049
    %v1121 = vunpack.c.l.b16 %v1050
    %v1122 = vunpack.c.l.b16 %v1051
    %v1123 = vunpack.c.l.b16 %v1052
    %v1124 = vunpack.c.l.b16 %v1053
    %v1125 = vunpack.c.l.b16 %v1054
    %v1126 = vunpack.c.l.b16 %v1055
    %v1127 = vunpack.c.l.b16 %v1056
    %v1128 = vunpack.c.l.b16 %v1057
    %v1129 = vunpack.c.l.b16 %v1058
    %v1130 = vpack.c.b16 %v1099, %v1098
    %v1131 = vpack.c.b16 %v1101, %v1100
    %v1132 = vpack.c.b16 %v1103, %v1102
    %v1133 = vpack.c.b16 %v1105, %v1104
    %v1134 = vpack.c.b16 %v1107, %v1106
    %v1135 = vpack.c.b16 %v1109, %v1108
    %v1136 = vpack.c.b16 %v1111, %v1110
    %v1137 = vpack.c.b16 %v1113, %v1112
    %v1138 = vpack.c.b16 %v1115, %v1114
    %v1139 = vpack.c.b16 %v1117, %v1116
    %v1140 = vpack.c.b16 %v1119, %v1118
    %v1141 = vpack.c.b16 %v1121, %v1120
    %v1142 = vpack.c.b16 %v1123, %v1122
    %v1143 = vpack.c.b16 %v1125, %v1124
    %v1144 = vpack.c.b16 %v1127, %v1126
    %v1145 = vpack.c.b16 %v1129, %v1128
    %1162 = vmatprep.subr.bf16.mxu0 0
    %1163 = vmatpush1.bf16.msra.mxu0 %v1130
    %1164 = vmatprep.subr.bf16.mxu0 0
    %1165 = vmatpush1.bf16.msra.mxu0 %v1131
    %1166 = vmatprep.subr.bf16.mxu0 0
    %1167 = vmatpush1.bf16.msra.mxu0 %v1132
    %1168 = vmatprep.subr.bf16.mxu0 0
    %1169 = vmatpush1.bf16.msra.mxu0 %v1133
    %1170 = vmatprep.subr.bf16.mxu0 0
    %1171 = vmatpush1.bf16.msra.mxu0 %v1134
    %1172 = vmatprep.subr.bf16.mxu0 0
    %1173 = vmatpush1.bf16.msra.mxu0 %v1135
    %1174 = vmatprep.subr.bf16.mxu0 0
    %1175 = vmatpush1.bf16.msra.mxu0 %v1136
    %1176 = vmatprep.subr.bf16.mxu0 0
    %1177 = vmatpush1.bf16.msra.mxu0 %v1137
    %1178 = vmatprep.subr.bf16.mxu0 0
    %1179 = vmatpush1.bf16.msra.mxu0 %v1138
    %1180 = vmatprep.subr.bf16.mxu0 0
    %1181 = vmatpush1.bf16.msra.mxu0 %v1139
    %1182 = vmatprep.subr.bf16.mxu0 0
    %1183 = vmatpush1.bf16.msra.mxu0 %v1140
    %1184 = vmatprep.subr.bf16.mxu0 0
    %1185 = vmatpush1.bf16.msra.mxu0 %v1141
    %1186 = vmatprep.subr.bf16.mxu0 0
    %1187 = vmatpush1.bf16.msra.mxu0 %v1142
    %1188 = vmatprep.subr.bf16.mxu0 0
    %1189 = vmatpush1.bf16.msra.mxu0 %v1143
    %1190 = vmatprep.subr.bf16.mxu0 0
    %1191 = vmatpush1.bf16.msra.mxu0 %v1144
    %1192 = vmatprep.subr.bf16.mxu0 0
    %1193 = vmatpush1.bf16.msra.mxu0 %v1145
    %1194 = vmatprep.mubr.bf16.mxu0 %v1026
    %1195 = vmatmul.mubr.bf16.gmra.mrb[0].mxu0 %v1025
    %v1196 = vpop.f32.mrb[0].mxu0
    %v1197 = vadd.f32 %v1064, %v1196
    %v1198 = vpop.f32.mrb[0].mxu0
    %v1199 = vpop.f32.mrb[0].mxu0
    %v1200 = vpop.f32.mrb[0].mxu0
    %1201 = vdwg.mxu0
    %v1202 = vmax.f32 %v1197, 0.0
    %v1203 = vpack.c.bf16 %v1202, %v1202
    %v1204 = vld [vmem:[%s5] sm:$0xf]
    %v1205 = vld [vmem:[%s5 + $0x4] sm:$0xf]
    %v1206 = vld [vmem:[%s5 + $0x8] sm:$0xf]
    %v1207 = vld [vmem:[%s5 + $0xc] sm:$0xf]
    %v1208 = vld [vmem:[%s5 + $0x10] sm:$0xf]
    %v1209 = vld [vmem:[%s5 + $0x14] sm:$0xf]
    %v1210 = vld [vmem:[%s5 + $0x18] sm:$0xf]
    %v1211 = vld [vmem:[%s5 + $0x1c] sm:$0xf]
    %v1212 = vld [vmem:[%s5 + $0x20] sm:$0xf]
    %v1213 = vld [vmem:[%s5 + $0x24] sm:$0xf]
    %v1214 = vld [vmem:[%s5 + $0x28] sm:$0xf]
    %v1215 = vld [vmem:[%s5 + $0x2c] sm:$0xf]
    %v1216 = vld [vmem:[%s5 + $0x30] sm:$0xf]
    %v1217 = vld [vmem:[%s5 + $0x34] sm:$0xf]
    %v1218 = vld [vmem:[%s5 + $0x38] sm:$0xf]
    %v1219 = vld [vmem:[%s5 + $0x3c] sm:$0xf]
    %v1220 = vld [vmem:[%s6] sm:$0x1]
    %v1222 = vlaneseq
    %v1223 = vshrl.u32 %v1222, 7
    %v1224 = vsub.s32 0, %v1223
    %v1225 = vrot.slane %v1220, %v1224
    %v1243 = vunpack.c.l.b16 %v1204
    %v1244 = vunpack.c.l.b16 %v1205
    %v1245 = vunpack.c.l.b16 %v1206
    %v1246 = vunpack.c.l.b16 %v1207
    %v1247 = vunpack.c.l.b16 %v1208
    %v1248 = vunpack.c.l.b16 %v1209
    %v1249 = vunpack.c.l.b16 %v1210
    %v1250 = vunpack.c.l.b16 %v1211
    %v1251 = vunpack.c.l.b16 %v1212
    %v1252 = vunpack.c.l.b16 %v1213
    %v1253 = vunpack.c.l.b16 %v1214
    %v1254 = vunpack.c.l.b16 %v1215
    %v1255 = vunpack.c.l.b16 %v1216
    %v1256 = vunpack.c.l.b16 %v1217
    %v1257 = vunpack.c.l.b16 %v1218
    %v1258 = vunpack.c.l.b16 %v1219
    %v1259 = vpack.c.b16 %v1244, %v1243
    %v1260 = vpack.c.b16 %v1246, %v1245
    %v1261 = vpack.c.b16 %v1248, %v1247
    %v1262 = vpack.c.b16 %v1250, %v1249
    %v1263 = vpack.c.b16 %v1252, %v1251
    %v1264 = vpack.c.b16 %v1254, %v1253
    %v1265 = vpack.c.b16 %v1256, %v1255
    %v1266 = vpack.c.b16 %v1258, %v1257
    %1275 = vmatprep.subr.bf16.mxu0 0
    %1276 = vmatpush1.bf16.msra.mxu0 %v1259
    %1277 = vmatprep.subr.bf16.mxu0 0
    %1278 = vmatpush1.bf16.msra.mxu0 %v1260
    %1279 = vmatprep.subr.bf16.mxu0 0
    %1280 = vmatpush1.bf16.msra.mxu0 %v1261
    %1281 = vmatprep.subr.bf16.mxu0 0
    %1282 = vmatpush1.bf16.msra.mxu0 %v1262
    %1283 = vmatprep.subr.bf16.mxu0 0
    %1284 = vmatpush1.bf16.msra.mxu0 %v1263
    %1285 = vmatprep.subr.bf16.mxu0 0
    %1286 = vmatpush1.bf16.msra.mxu0 %v1264
    %1287 = vmatprep.subr.bf16.mxu0 0
    %1288 = vmatpush1.bf16.msra.mxu0 %v1265
    %1289 = vmatprep.subr.bf16.mxu0 0
    %1290 = vmatpush1.bf16.msra.mxu0 %v1266
    %1291 = vmatprep.subr.bf16.mxu0 0
    %1292 = vmatpush1.bf16.msra.mxu0 0
    %1293 = vmatprep.subr.bf16.mxu0 0
    %1294 = vmatpush1.bf16.msra.mxu0 0
    %1295 = vmatprep.subr.bf16.mxu0 0
    %1296 = vmatpush1.bf16.msra.mxu0 0
    %1297 = vmatprep.subr.bf16.mxu0 0
    %1298 = vmatpush1.bf16.msra.mxu0 0
    %1299 = vmatprep.subr.bf16.mxu0 0
    %1300 = vmatpush1.bf16.msra.mxu0 0
    %1301 = vmatprep.subr.bf16.mxu0 0
    %1302 = vmatpush1.bf16.msra.mxu0 0
    %1303 = vmatprep.subr.bf16.mxu0 0
    %1304 = vmatpush1.bf16.msra.mxu0 0
    %1305 = vmatprep.subr.bf16.mxu0 0
    %1306 = vmatpush1.bf16.msra.mxu0 0
    %1307 = vmatprep.mubr.bf16.mxu0 0
    %1308 = vmatmul.mubr.bf16.gmra.mrb[0].mxu0 %v1203
    %v1309 = vpop.f32.mrb[0].mxu0
    %v1310 = vadd.f32 %v1225, %v1309
    %v1311 = vpop.f32.mrb[0].mxu0
    %v1312 = vpop.f32.mrb[0].mxu0
    %v1313 = vpop.f32.mrb[0].mxu0
    %1314 = vdwg.mxu0
    %v1315 = vmax.f32 %v1310, 0.0
    %v1316 = vpack.c.bf16 %v1315, %v1315
    %v1317 = vld [vmem:[%s7] sm:$0xf]
    %v1318 = vld [vmem:[%s7 + $0x4] sm:$0xf]
    %v1319 = vld [vmem:[%s7 + $0x8] sm:$0xf]
    %v1320 = vld [vmem:[%s7 + $0xc] sm:$0xf]
    %v1321 = vld [vmem:[%s8] sm:$0x1]
    %v1323 = vlaneseq
    %v1324 = vshrl.u32 %v1323, 7
    %v1325 = vsub.s32 0, %v1324
    %v1326 = vrot.slane %v1321, %v1325
    %v1332 = vunpack.c.l.b16 %v1317
    %v1333 = vunpack.c.l.b16 %v1318
    %v1334 = vunpack.c.l.b16 %v1319
    %v1335 = vunpack.c.l.b16 %v1320
    %v1336 = vpack.c.b16 %v1333, %v1332
    %v1337 = vpack.c.b16 %v1335, %v1334
    %vm1340 = vcmask 261120
    %v1342 = vsel %vm1340, %v1316, 0
    %1344 = vmatprep.subr.bf16.mxu0 0
    %1345 = vmatpush1.bf16.msra.mxu0 %v1336
    %1346 = vmatprep.subr.bf16.mxu0 0
    %1347 = vmatpush1.bf16.msra.mxu0 %v1337
    %1348 = vmatprep.subr.bf16.mxu0 0
    %1349 = vmatpush1.bf16.msra.mxu0 0
    %1350 = vmatprep.subr.bf16.mxu0 0
    %1351 = vmatpush1.bf16.msra.mxu0 0
    %1352 = vmatprep.subr.bf16.mxu0 0
    %1353 = vmatpush1.bf16.msra.mxu0 0
    %1354 = vmatprep.subr.bf16.mxu0 0
    %1355 = vmatpush1.bf16.msra.mxu0 0
    %1356 = vmatprep.subr.bf16.mxu0 0
    %1357 = vmatpush1.bf16.msra.mxu0 0
    %1358 = vmatprep.subr.bf16.mxu0 0
    %1359 = vmatpush1.bf16.msra.mxu0 0
    %1360 = vmatprep.subr.bf16.mxu0 0
    %1361 = vmatpush1.bf16.msra.mxu0 0
    %1362 = vmatprep.subr.bf16.mxu0 0
    %1363 = vmatpush1.bf16.msra.mxu0 0
    %1364 = vmatprep.subr.bf16.mxu0 0
    %1365 = vmatpush1.bf16.msra.mxu0 0
    %1366 = vmatprep.subr.bf16.mxu0 0
    %1367 = vmatpush1.bf16.msra.mxu0 0
    %1368 = vmatprep.subr.bf16.mxu0 0
    %1369 = vmatpush1.bf16.msra.mxu0 0
    %1370 = vmatprep.subr.bf16.mxu0 0
    %1371 = vmatpush1.bf16.msra.mxu0 0
    %1372 = vmatprep.subr.bf16.mxu0 0
    %1373 = vmatpush1.bf16.msra.mxu0 0
    %1374 = vmatprep.subr.bf16.mxu0 0
    %1375 = vmatpush1.bf16.msra.mxu0 0
    %1376 = vmatprep.mubr.bf16.mxu0 0
    %1377 = vmatmul.mubr.bf16.gmra.mrb[0].mxu0 %v1342
    %v1378 = vpop.f32.mrb[0].mxu0
    %v1379 = vadd.f32 %v1326, %v1378
    %v1380 = vpop.f32.mrb[0].mxu0
    %v1381 = vpop.f32.mrb[0].mxu0
    %v1382 = vpop.f32.mrb[0].mxu0
    %1383 = vdwg.mxu0
    %1384 = vst [vmem:[%s9] sm:$0xff] %v1379
    // Predicated region
    $region42: #{cnn2d_simple_forward.1} parent=1 // pred_check
      _
    $region43: #{cnn2d_simple_forward.1} parent=1 // pred_check_branch
      %1386 = sbr.rel (0) target = $region45
    $region44: #{cnn2d_simple_forward.1} parent=1 // pred_region
      _
    $region45: #{cnn2d_simple_forward.1} parent=1 // pred_fallthru
      _
    // Predicated region
    $region46: #{cnn2d_simple_forward.1} parent=1 // pred_check
      _
    $region47: #{cnn2d_simple_forward.1} parent=1 // pred_check_branch
      %1388 = sbr.rel (0) target = $region49
    $region48: #{cnn2d_simple_forward.1} parent=1 // pred_region
      _
    $region49: #{cnn2d_simple_forward.1} parent=1 // pred_fallthru
      _
    %1389 = vsyncpa [#allocation3], 1

</llo_original>
